<compile_context>
chip_gen: v7x
topology: tpu7x:2x2x1
jax: 0.10.0
libtpu: 0.0.40
codegen_flags: <defaults>
</compile_context>

<pallas_src>
import numpy as np
import jax
import jax.numpy as jnp
from jax.experimental import pallas as pl
from jax.experimental.pallas import tpu as pltpu

NUM_JOINTS = 42  # module hard-codes expand(..., 42, ...), so num_joints == 42


def _keypoints_kernel(coords_ref, w_ref, r_ref, e_ref, t_ref, pred_ref, anc_ref):
    # coords_ref: (LB, a, J*D)  lane-dense
    # w_ref     : (LB, a, J)
    # r_ref     : (LB, a, D)
    # e_ref     : (J, J*D)  one-hot: E[j, j*D + d] = 1   (lane k -> joint k // D)
    # t_ref     : (D, J*D)  one-hot: T[d, j*D + d] = 1   (lane k -> coord k % D)
    lb, a, jd = coords_ref.shape
    j = w_ref.shape[-1]
    d = r_ref.shape[-1]

    # softmax over the anchor axis (axis=1 here == dim=2 in torch), in f32.
    w = w_ref[...].astype(jnp.float32)
    w = w - jnp.max(w, axis=1, keepdims=True)
    ew = jnp.exp(w)
    inv_den = pl.reciprocal(jnp.sum(ew, axis=1, keepdims=True), approx=False)
    sm = ew * inv_den                                            # (LB, a, J)

    coords = coords_ref[...].astype(jnp.float32)                 # (LB, a, JD)
    refs = r_ref[...].astype(jnp.float32)                        # (LB, a, D)

    # Expand softmax weights / references to the lane-dense J*D layout with
    # tiny one-hot matmuls (leading-dim reshape is layout-preserving).
    sm_rep = jnp.dot(sm.reshape(lb * a, j), e_ref[...],
                     preferred_element_type=jnp.float32).reshape(lb, a, jd)
    refs_rep = jnp.dot(refs.reshape(lb * a, d), t_ref[...],
                       preferred_element_type=jnp.float32).reshape(lb, a, jd)

    # anc  = sum_a sm * refs        (lane-dense)
    # pred = anc + sum_a sm * coords   (== sum_a sm * (refs + coords))
    anc = jnp.sum(sm_rep * refs_rep, axis=1)                     # (LB, JD)
    pred = anc + jnp.sum(sm_rep * coords, axis=1)                # (LB, JD)

    pred_ref[...] = pred.astype(pred_ref.dtype)
    anc_ref[...] = anc.astype(anc_ref.dtype)


def generate_keypoints_coord_new(total_coords, total_weights, total_references,
                                 num_joints=NUM_JOINTS):
    lvl, batch, a, c = total_coords.shape
    J = num_joints
    assert c % J == 0, f"last dim {c} must be a multiple of num_joints={J}"
    D = c // J
    assert D == 3, "module semantics assume 3-D keypoints"
    LB = lvl * batch
    JD = J * D

    # Leading-dim collapses only: metadata-only reshapes, no HBM relayout.
    coords2 = total_coords.reshape(LB, a, JD)
    w2 = total_weights.reshape(LB, a, J)
    r2 = total_references.reshape(LB, a, D)

    # Constant one-hot expansion matrices (built host-side, passed as inputs).
    E_np = np.zeros((J, JD), dtype=np.float32)
    E_np[np.repeat(np.arange(J), D), np.arange(JD)] = 1.0        # k -> k // D
    T_np = np.tile(np.eye(D, dtype=np.float32), (1, J))          # k -> k %  D
    E = jnp.asarray(E_np)
    T = jnp.asarray(T_np)

    out_shape = (
        jax.ShapeDtypeStruct((LB, JD), total_coords.dtype),
        jax.ShapeDtypeStruct((LB, JD), total_coords.dtype),
    )

    pred_flat, anc_flat = pl.pallas_call(
        _keypoints_kernel,
        out_shape=out_shape,
        grid=(1,),
        in_specs=[
            pl.BlockSpec((LB, a, JD), lambda i: (0, 0, 0)),
            pl.BlockSpec((LB, a, J), lambda i: (0, 0, 0)),
            pl.BlockSpec((LB, a, D), lambda i: (0, 0, 0)),
            pl.BlockSpec((J, JD), lambda i: (0, 0)),
            pl.BlockSpec((D, JD), lambda i: (0, 0)),
        ],
        out_specs=(
            pl.BlockSpec((LB, JD), lambda i: (0, 0)),
            pl.BlockSpec((LB, JD), lambda i: (0, 0)),
        ),
        compiler_params=pltpu.CompilerParams(
            dimension_semantics=("arbitrary",)),
    )(coords2, w2, r2, E, T)

    # Free wrapper-side reshapes back to the PyTorch output layout.
    pred = pred_flat.reshape(lvl, batch, J, D)
    anc = anc_flat.reshape(lvl, batch, J, D)
    return pred, anc


def _reference(total_coords, total_weights, total_references, num_joints=NUM_JOINTS):
    lvl, b, a, _ = total_coords.shape
    coords = total_coords.reshape(lvl, b, a, num_joints, -1)
    sm = jax.nn.softmax(total_weights, axis=2)
    w = sm[..., None]
    kp = total_references[:, :, :, None, :] + coords
    pred = (kp * w).sum(axis=2)
    anc = (total_references[:, :, :, None, :] * w).sum(axis=2)
    return pred, anc


if __name__ == "__main__":
    lvl_num, batch_size, a, J, D = 2, 2, 8, NUM_JOINTS, 3

    key = jax.random.PRNGKey(0)
    k1, k2, k3 = jax.random.split(key, 3)
    total_coords = jax.random.normal(k1, (lvl_num, batch_size, a, J * D), dtype=jnp.float32)
    total_weights = jax.random.normal(k2, (lvl_num, batch_size, a, J), dtype=jnp.float32)
    total_references = jax.random.normal(k3, (lvl_num, batch_size, a, D), dtype=jnp.float32)

    pred, anchors = generate_keypoints_coord_new(total_coords, total_weights, total_references)
    jax.block_until_ready((pred, anchors))

    pred_ref, anchors_ref = _reference(total_coords, total_weights, total_references)
    assert pred.shape == (lvl_num, batch_size, J, D)
    assert anchors.shape == (lvl_num, batch_size, J, D)
    assert jnp.allclose(pred, pred_ref, atol=1e-5, rtol=1e-5)
    assert jnp.allclose(anchors, anchors_ref, atol=1e-5, rtol=1e-5)

    print("KERNEL_OK")
</pallas_src>

<mosaic_0001>
module attributes {stable_mosaic.version = 11 : i64} {
  func.func @_keypoints_kernel(%arg0: i32, %arg1: memref<4x8x126xf32, #tpu.memory_space<vmem>>, %arg2: memref<4x8x42xf32, #tpu.memory_space<vmem>>, %arg3: memref<4x8x3xf32, #tpu.memory_space<vmem>>, %arg4: memref<42x126xf32, #tpu.memory_space<vmem>>, %arg5: memref<3x126xf32, #tpu.memory_space<vmem>>, %arg6: memref<4x126xf32, #tpu.memory_space<vmem>>, %arg7: memref<4x126xf32, #tpu.memory_space<vmem>>) attributes {dimension_semantics = [#tpu.dimension_semantics<arbitrary>], iteration_bounds = array<i64: 1>, scalar_prefetch = 0 : i64, scratch_operands = 0 : i64, tpu.core_type = #tpu.core_type<tc>, window_params = [{pipeline_mode = #tpu.pipeline_mode<synchronous>, transform_indices = @transform_0, window_bounds = array<i64: 4, 8, 126>}, {pipeline_mode = #tpu.pipeline_mode<synchronous>, transform_indices = @transform_1, window_bounds = array<i64: 4, 8, 42>}, {pipeline_mode = #tpu.pipeline_mode<synchronous>, transform_indices = @transform_2, window_bounds = array<i64: 4, 8, 3>}, {pipeline_mode = #tpu.pipeline_mode<synchronous>, transform_indices = @transform_3, window_bounds = array<i64: 42, 126>}, {pipeline_mode = #tpu.pipeline_mode<synchronous>, transform_indices = @transform_4, window_bounds = array<i64: 3, 126>}, {pipeline_mode = #tpu.pipeline_mode<synchronous>, transform_indices = @transform_5, window_bounds = array<i64: 4, 126>}, {pipeline_mode = #tpu.pipeline_mode<synchronous>, transform_indices = @transform_6, window_bounds = array<i64: 4, 126>}]} {
    %c0 = arith.constant 0 : index
    %c0_0 = arith.constant 0 : index
    %c0_1 = arith.constant 0 : index
    %0 = vector.load %arg2[%c0, %c0_0, %c0_1] : memref<4x8x42xf32, #tpu.memory_space<vmem>>, vector<4x8x42xf32>
    %cst = arith.constant dense<0xFF800000> : vector<4x42xf32>
    %1 = vector.multi_reduction <maximumf>, %0, %cst [1] : vector<4x8x42xf32> to vector<4x42xf32>
    %2 = vector.shape_cast %1 : vector<4x42xf32> to vector<4x1x42xf32>
    %3 = vector.broadcast %2 : vector<4x1x42xf32> to vector<4x8x42xf32>
    %4 = arith.subf %0, %3 : vector<4x8x42xf32>
    %5 = math.exp %4 : vector<4x8x42xf32>
    %cst_2 = arith.constant dense<0.000000e+00> : vector<4x42xf32>
    %6 = vector.multi_reduction <add>, %5, %cst_2 [1] : vector<4x8x42xf32> to vector<4x42xf32>
    %7 = vector.shape_cast %6 : vector<4x42xf32> to vector<4x1x42xf32>
    %8 = tpu.reciprocal %7 : vector<4x1x42xf32> -> vector<4x1x42xf32>
    %9 = vector.broadcast %8 : vector<4x1x42xf32> to vector<4x8x42xf32>
    %10 = arith.mulf %5, %9 : vector<4x8x42xf32>
    %c0_3 = arith.constant 0 : index
    %c0_4 = arith.constant 0 : index
    %c0_5 = arith.constant 0 : index
    %11 = vector.load %arg1[%c0_3, %c0_4, %c0_5] : memref<4x8x126xf32, #tpu.memory_space<vmem>>, vector<4x8x126xf32>
    %c0_6 = arith.constant 0 : index
    %c0_7 = arith.constant 0 : index
    %c0_8 = arith.constant 0 : index
    %12 = vector.load %arg3[%c0_6, %c0_7, %c0_8] : memref<4x8x3xf32, #tpu.memory_space<vmem>>, vector<4x8x3xf32>
    %13 = vector.shape_cast %10 : vector<4x8x42xf32> to vector<32x42xf32>
    %c0_9 = arith.constant 0 : index
    %c0_10 = arith.constant 0 : index
    %14 = vector.load %arg4[%c0_9, %c0_10] : memref<42x126xf32, #tpu.memory_space<vmem>>, vector<42x126xf32>
    %cst_11 = arith.constant dense<0.000000e+00> : vector<32x126xf32>
    %15 = tpu.matmul %13, %14, %cst_11 {dimension_numbers = #tpu.dot_dimension_numbers<[1], [0], [0], [1], [0, 0, 1, 1], [], []>} : vector<32x42xf32>, vector<42x126xf32>, vector<32x126xf32> -> vector<32x126xf32>
    %16 = vector.shape_cast %15 : vector<32x126xf32> to vector<4x8x126xf32>
    %17 = vector.shape_cast %12 : vector<4x8x3xf32> to vector<32x3xf32>
    %c0_12 = arith.constant 0 : index
    %c0_13 = arith.constant 0 : index
    %18 = vector.load %arg5[%c0_12, %c0_13] : memref<3x126xf32, #tpu.memory_space<vmem>>, vector<3x126xf32>
    %cst_14 = arith.constant dense<0.000000e+00> : vector<32x126xf32>
    %19 = tpu.matmul %17, %18, %cst_14 {dimension_numbers = #tpu.dot_dimension_numbers<[1], [0], [0], [1], [0, 0, 1, 1], [], []>} : vector<32x3xf32>, vector<3x126xf32>, vector<32x126xf32> -> vector<32x126xf32>
    %20 = vector.shape_cast %19 : vector<32x126xf32> to vector<4x8x126xf32>
    %21 = arith.mulf %16, %20 : vector<4x8x126xf32>
    %cst_15 = arith.constant dense<0.000000e+00> : vector<4x126xf32>
    %22 = vector.multi_reduction <add>, %21, %cst_15 [1] : vector<4x8x126xf32> to vector<4x126xf32>
    %23 = arith.mulf %16, %11 : vector<4x8x126xf32>
    %cst_16 = arith.constant dense<0.000000e+00> : vector<4x126xf32>
    %24 = vector.multi_reduction <add>, %23, %cst_16 [1] : vector<4x8x126xf32> to vector<4x126xf32>
    %25 = arith.addf %22, %24 : vector<4x126xf32>
    %c0_17 = arith.constant 0 : index
    %c0_18 = arith.constant 0 : index
    %26 = vector.load %arg6[%c0_17, %c0_18] : memref<4x126xf32, #tpu.memory_space<vmem>>, vector<4x126xf32>
    tpu.vector_store %arg6[%c0_17, %c0_18], %25 {strides = array<i32>} : memref<4x126xf32, #tpu.memory_space<vmem>>, vector<4x126xf32>,
    %c0_19 = arith.constant 0 : index
    %c0_20 = arith.constant 0 : index
    %27 = vector.load %arg7[%c0_19, %c0_20] : memref<4x126xf32, #tpu.memory_space<vmem>>, vector<4x126xf32>
    tpu.vector_store %arg7[%c0_19, %c0_20], %22 {strides = array<i32>} : memref<4x126xf32, #tpu.memory_space<vmem>>, vector<4x126xf32>,
    return
  }
  func.func @transform_0(%arg0: i32) -> (i32, i32, i32) {
    %c0_i32 = arith.constant 0 : i32
    %c0_i32_0 = arith.constant 0 : i32
    %c0_i32_1 = arith.constant 0 : i32
    %c0_i32_2 = arith.constant 0 : i32
    return %c0_i32, %c0_i32_0, %c0_i32_1 : i32, i32, i32
  }
  func.func @transform_1(%arg0: i32) -> (i32, i32, i32) {
    %c0_i32 = arith.constant 0 : i32
    %c0_i32_0 = arith.constant 0 : i32
    %c0_i32_1 = arith.constant 0 : i32
    %c0_i32_2 = arith.constant 0 : i32
    return %c0_i32, %c0_i32_0, %c0_i32_1 : i32, i32, i32
  }
  func.func @transform_2(%arg0: i32) -> (i32, i32, i32) {
    %c0_i32 = arith.constant 0 : i32
    %c0_i32_0 = arith.constant 0 : i32
    %c0_i32_1 = arith.constant 0 : i32
    %c0_i32_2 = arith.constant 0 : i32
    return %c0_i32, %c0_i32_0, %c0_i32_1 : i32, i32, i32
  }
  func.func @transform_3(%arg0: i32) -> (i32, i32) {
    %c0_i32 = arith.constant 0 : i32
    %c0_i32_0 = arith.constant 0 : i32
    %c0_i32_1 = arith.constant 0 : i32
    return %c0_i32, %c0_i32_0 : i32, i32
  }
  func.func @transform_4(%arg0: i32) -> (i32, i32) {
    %c0_i32 = arith.constant 0 : i32
    %c0_i32_0 = arith.constant 0 : i32
    %c0_i32_1 = arith.constant 0 : i32
    return %c0_i32, %c0_i32_0 : i32, i32
  }
  func.func @transform_5(%arg0: i32) -> (i32, i32) {
    %c0_i32 = arith.constant 0 : i32
    %c0_i32_0 = arith.constant 0 : i32
    %c0_i32_1 = arith.constant 0 : i32
    return %c0_i32, %c0_i32_0 : i32, i32
  }
  func.func @transform_6(%arg0: i32) -> (i32, i32) {
    %c0_i32 = arith.constant 0 : i32
    %c0_i32_0 = arith.constant 0 : i32
    %c0_i32_1 = arith.constant 0 : i32
    return %c0_i32, %c0_i32_0 : i32, i32
  }
}

</mosaic_0001>

<llo_original>
// kernel: tpu_custom_call.1
$region0: #{tpu_custom_call.1}
  #allocation0 [shape = 'u32[]', space=smem, size = 0x4, offset = 0x4, fixed_abs, tag = 'smem constant byte address 0x4 - core index']
  #allocation1 [shape = 'u32[144,128]{1,0:T(1,128)}', space=vmem, size = 0x12000, scoped, tag = 'internal scratch']
  %s0 = inlined_call_operand.hbm [shape: f32[4,8,126], index: 0, kind: input, shape index: {}]
  %s1 = inlined_call_operand.hbm [shape: f32[4,8,42], index: 1, kind: input, shape index: {}]
  %s2 = inlined_call_operand.vmem [shape: f32[4,8,3], index: 2, kind: input, shape index: {}]
  %s3 = inlined_call_operand.vmem [shape: f32[42,126], index: 3, kind: input, shape index: {}]
  %s4 = inlined_call_operand.vmem [shape: f32[3,126], index: 4, kind: input, shape index: {}]
  %s5 = inlined_call_operand.hbm [shape: f32[4,126], index: 5, kind: output, shape index: {0}]
  %s6 = inlined_call_operand.hbm [shape: f32[4,126], index: 6, kind: output, shape index: {1}]
  %7 = xla_tuple %s5, %s6
  %s8 = sld [smem:[#allocation0]]
  $region46: #{tpu_custom_call.1} parent=0
    _
  %s10 = ssub.s32 1, %s8
  %s11 = scalar_select 0, %s10, %s8
  $region1: #{tpu_custom_call.1} parent=0
    #allocation2 [shape = 'u8[16384]{0}', space=vmem, size = 0x4000, scoped, tag = 'input window, operand 0, single buffered']
    #allocation3 [shape = 's32[1]{0}', space=sflag, size = 0x4, scoped, tag = 'scoped memory for tpu_custom_call.1']
    #allocation4 [shape = 's32[1]{0}', space=sflag, size = 0x4, scoped, tag = 'scoped memory for tpu_custom_call.1']
    #allocation5 [shape = 'u8[16384]{0}', space=vmem, size = 0x4000, scoped, tag = 'input window, operand 1, single buffered']
    #allocation6 [shape = 's32[1]{0}', space=sflag, size = 0x4, scoped, tag = 'scoped memory for tpu_custom_call.1']
    #allocation7 [shape = 'u8[2048]{0}', space=vmem, size = 0x800, scoped, tag = 'output window, operand 0, single buffered']
    #allocation8 [shape = 'u8[2048]{0}', space=vmem, size = 0x800, scoped, tag = 'output window, operand 1, single buffered']
    #allocation9 [shape = 's32[1]{0}', space=sflag, size = 0x4, scoped, tag = 'scoped memory for tpu_custom_call.1']
    %12 = vsyncpa [#allocation3], 0
    %13 = vsyncpa [#allocation6], 0
    %14 = vsyncpa [#allocation4], 0
    %15 = vsyncpa [#allocation9], 0
    // Predicated region
    $region2: #{tpu_custom_call.1} parent=1 // pred_check
      _
    $region3: #{tpu_custom_call.1} parent=1 // pred_check_branch
      %17 = sbr.rel (0) target = $region5
    $region4: #{tpu_custom_call.1} parent=1 // pred_region
      %s19 = ssub.s32 512, 512
      %20 = vsyncadd [#allocation3], %s19
      %s21 = sshll.u32 [#allocation2], 4
      %s22 = int_to_ptr.vmem [resolvable:$true] %s21
      %27 = dma.hbm_to_vmem [thread:$0]  %s0, 512, %s22, [#allocation3], 128, 128, 8
    $region5: #{tpu_custom_call.1} parent=1 // pred_fallthru
      _
    // Predicated region
    $region6: #{tpu_custom_call.1} parent=1 // pred_check
      _
    $region7: #{tpu_custom_call.1} parent=1 // pred_check_branch
      %29 = sbr.rel (0) target = $region9
    $region8: #{tpu_custom_call.1} parent=1 // pred_region
      %s31 = ssub.s32 512, 512
      %32 = vsyncadd [#allocation6], %s31
      %s33 = sshll.u32 [#allocation5], 4
      %s34 = int_to_ptr.vmem [resolvable:$true] %s33
      %39 = dma.hbm_to_vmem [thread:$0]  %s1, 512, %s34, [#allocation6], 128, 128, 8
    $region9: #{tpu_custom_call.1} parent=1 // pred_fallthru
      _
    // Predicated region
    $region10: #{tpu_custom_call.1} parent=1 // pred_check
      _
    $region11: #{tpu_custom_call.1} parent=1 // pred_check_branch
      %41 = sbr.rel (0) target = $region13
    $region12: #{tpu_custom_call.1} parent=1 // pred_region
      _
    $region13: #{tpu_custom_call.1} parent=1 // pred_fallthru
      _
    // Predicated region
    $region14: #{tpu_custom_call.1} parent=1 // pred_check
      _
    $region15: #{tpu_custom_call.1} parent=1 // pred_check_branch
      %43 = sbr.rel (0) target = $region17
    $region16: #{tpu_custom_call.1} parent=1 // pred_region
      _
    $region17: #{tpu_custom_call.1} parent=1 // pred_fallthru
      _
    // Predicated region
    $region18: #{tpu_custom_call.1} parent=1 // pred_check
      _
    $region19: #{tpu_custom_call.1} parent=1 // pred_check_branch
      %45 = sbr.rel (0) target = $region21
    $region20: #{tpu_custom_call.1} parent=1 // pred_region
      _
    $region21: #{tpu_custom_call.1} parent=1 // pred_fallthru
      _
    // Predicated region
    $region22: #{tpu_custom_call.1} parent=1 // pred_check
      _
    $region23: #{tpu_custom_call.1} parent=1 // pred_check_branch
      %47 = sbr.rel (0) target = $region25
    $region24: #{tpu_custom_call.1} parent=1 // pred_region
      %48 = dma.done [#allocation3], 512
    $region25: #{tpu_custom_call.1} parent=1 // pred_fallthru
      _
    // Predicated region
    $region26: #{tpu_custom_call.1} parent=1 // pred_check
      _
    $region27: #{tpu_custom_call.1} parent=1 // pred_check_branch
      %50 = sbr.rel (0) target = $region29
    $region28: #{tpu_custom_call.1} parent=1 // pred_region
      %51 = dma.done [#allocation6], 512
    $region29: #{tpu_custom_call.1} parent=1 // pred_fallthru
      _
    %v52 = vld [vmem:[#allocation5] sm:$0xff]
    %v53 = vld [vmem:[#allocation5 + $0x8] sm:$0xff]
    %v54 = vld [vmem:[#allocation5 + $0x10] sm:$0xff]
    %v55 = vld [vmem:[#allocation5 + $0x18] sm:$0xff]
    %vm56 = vcmask 343040
    %v57 = vsel %vm56, %v52, -inf
    %v58 = vrot.slane %v57, 4
    %v59 = vmax.f32 %v57, %v58
    %v60 = vrot.slane %v59, 2
    %v61 = vmax.f32 %v59, %v60
    %v62 = vrot.slane %v61, 1
    %v63 = vmax.f32 %v61, %v62
    %v64 = vsel %vm56, %v53, -inf
    %v65 = vrot.slane %v64, 4
    %v66 = vmax.f32 %v64, %v65
    %v67 = vrot.slane %v66, 2
    %v68 = vmax.f32 %v66, %v67
    %v69 = vrot.slane %v68, 1
    %v70 = vmax.f32 %v68, %v69
    %v71 = vsel %vm56, %v54, -inf
    %v72 = vrot.slane %v71, 4
    %v73 = vmax.f32 %v71, %v72
    %v74 = vrot.slane %v73, 2
    %v75 = vmax.f32 %v73, %v74
    %v76 = vrot.slane %v75, 1
    %v77 = vmax.f32 %v75, %v76
    %v78 = vsel %vm56, %v55, -inf
    %v79 = vrot.slane %v78, 4
    %v80 = vmax.f32 %v78, %v79
    %v81 = vrot.slane %v80, 2
    %v82 = vmax.f32 %v80, %v81
    %v83 = vrot.slane %v82, 1
    %v84 = vmax.f32 %v82, %v83
    %v85 = vsub.f32 %v52, %v63
    %v86 = vsub.f32 %v53, %v70
    %v87 = vsub.f32 %v54, %v77
    %v88 = vsub.f32 %v55, %v84
    %v89 = vmul.f32 %v85, 1.442695
    %v90 = vpow.pop %v89
    %v91 = vmul.f32 %v86, 1.442695
    %v92 = vpow.pop %v91
    %v93 = vmul.f32 %v87, 1.442695
    %v94 = vpow.pop %v93
    %v95 = vmul.f32 %v88, 1.442695
    %v96 = vpow.pop %v95
    %v97 = vsel %vm56, %v90, 0.0
    %v98 = vrot.slane %v97, 4
    %v99 = vadd.f32 %v97, %v98
    %v100 = vrot.slane %v99, 2
    %v101 = vadd.f32 %v99, %v100
    %v102 = vrot.slane %v101, 1
    %v103 = vadd.f32 %v101, %v102
    %v104 = vsel %vm56, %v92, 0.0
    %v105 = vrot.slane %v104, 4
    %v106 = vadd.f32 %v104, %v105
    %v107 = vrot.slane %v106, 2
    %v108 = vadd.f32 %v106, %v107
    %v109 = vrot.slane %v108, 1
    %v110 = vadd.f32 %v108, %v109
    %v111 = vsel %vm56, %v94, 0.0
    %v112 = vrot.slane %v111, 4
    %v113 = vadd.f32 %v111, %v112
    %v114 = vrot.slane %v113, 2
    %v115 = vadd.f32 %v113, %v114
    %v116 = vrot.slane %v115, 1
    %v117 = vadd.f32 %v115, %v116
    %v118 = vsel %vm56, %v96, 0.0
    %v119 = vrot.slane %v118, 4
    %v120 = vadd.f32 %v118, %v119
    %v121 = vrot.slane %v120, 2
    %v122 = vadd.f32 %v120, %v121
    %v123 = vrot.slane %v122, 1
    %v124 = vadd.f32 %v122, %v123
    %v125 = vrcp.pop %v103
    %v126 = vrcp.pop %v110
    %v127 = vrcp.pop %v117
    %v128 = vrcp.pop %v124
    %v129 = vmul.f32 %v90, %v125
    %v130 = vmul.f32 %v92, %v126
    %v131 = vmul.f32 %v94, %v127
    %v132 = vmul.f32 %v96, %v128
    %v133 = vld [vmem:[#allocation2] sm:$0xff]
    %v134 = vld [vmem:[#allocation2 + $0x8] sm:$0xff]
    %v135 = vld [vmem:[#allocation2 + $0x10] sm:$0xff]
    %v136 = vld [vmem:[#allocation2 + $0x18] sm:$0xff]
    %v137 = vld [vmem:[%s2] sm:$0xff]
    %v138 = vld [vmem:[%s2 + $0x8] sm:$0xff]
    %v139 = vld [vmem:[%s2 + $0x10] sm:$0xff]
    %v140 = vld [vmem:[%s2 + $0x18] sm:$0xff]
    %v141 = vld [vmem:[%s3] sm:$0xff]
    %v142 = vld [vmem:[%s3 + $0x8] sm:$0xff]
    %v143 = vld [vmem:[%s3 + $0x10] sm:$0xff]
    %v144 = vld [vmem:[%s3 + $0x18] sm:$0xff]
    %v145 = vld [vmem:[%s3 + $0x20] sm:$0xff]
    %v146 = vld [vmem:[%s3 + $0x28] sm:$0x3]
    %v148 = vsel %vm56, %v129, 0
    %v151 = vsel %vm56, %v130, 0
    %v154 = vsel %vm56, %v131, 0
    %v157 = vsel %vm56, %v132, 0
    %vm159 = vcmask 1041408
    %v161 = vsel %vm159, %v146, 0
    %163 = vmatprep.subr.mxu0 0.0
    %164 = vmatpush1.msra.mxu0 %v141
    %165 = vmatprep.subr.mxu0 0.0
    %166 = vmatpush1.msra.mxu0 %v142
    %167 = vmatprep.subr.mxu0 0.0
    %168 = vmatpush1.msra.mxu0 %v143
    %169 = vmatprep.subr.mxu0 0.0
    %170 = vmatpush1.msra.mxu0 %v144
    %171 = vmatprep.subr.mxu0 0.0
    %172 = vmatpush1.msra.mxu0 %v145
    %173 = vmatprep.subr.mxu0 0.0
    %174 = vmatpush1.msra.mxu0 %v161
    %175 = vmatprep.subr.mxu0 0.0
    %176 = vmatpush1.msra.mxu0 0.0
    %177 = vmatprep.subr.mxu0 0.0
    %178 = vmatpush1.msra.mxu0 0.0
    %179 = vmatprep.subr.mxu0 0.0
    %180 = vmatpush1.msra.mxu0 0.0
    %181 = vmatprep.subr.mxu0 0.0
    %182 = vmatpush1.msra.mxu0 0.0
    %183 = vmatprep.subr.mxu0 0.0
    %184 = vmatpush1.msra.mxu0 0.0
    %185 = vmatprep.subr.mxu0 0.0
    %186 = vmatpush1.msra.mxu0 0.0
    %187 = vmatprep.subr.mxu0 0.0
    %188 = vmatpush1.msra.mxu0 0.0
    %189 = vmatprep.subr.mxu0 0.0
    %190 = vmatpush1.msra.mxu0 0.0
    %191 = vmatprep.subr.mxu0 0.0
    %192 = vmatpush1.msra.mxu0 0.0
    %193 = vmatprep.subr.mxu0 0.0
    %194 = vmatpush1.msra.mxu0 0.0
    %195 = vmatprep.subr.mxu0 0.0
    %196 = vmatpush1.msra.mxu0 0.0
    %197 = vmatprep.subr.mxu0 0.0
    %198 = vmatpush1.msra.mxu0 0.0
    %199 = vmatprep.subr.mxu0 0.0
    %200 = vmatpush1.msra.mxu0 0.0
    %201 = vmatprep.subr.mxu0 0.0
    %202 = vmatpush1.msra.mxu0 0.0
    %203 = vmatprep.subr.mxu0 0.0
    %204 = vmatpush1.msra.mxu0 0.0
    %205 = vmatprep.subr.mxu0 0.0
    %206 = vmatpush1.msra.mxu0 0.0
    %207 = vmatprep.subr.mxu0 0.0
    %208 = vmatpush1.msra.mxu0 0.0
    %209 = vmatprep.subr.mxu0 0.0
    %210 = vmatpush1.msra.mxu0 0.0
    %211 = vmatprep.subr.mxu0 0.0
    %212 = vmatpush1.msra.mxu0 0.0
    %213 = vmatprep.subr.mxu0 0.0
    %214 = vmatpush1.msra.mxu0 0.0
    %215 = vmatprep.subr.mxu0 0.0
    %216 = vmatpush1.msra.mxu0 0.0
    %217 = vmatprep.subr.mxu0 0.0
    %218 = vmatpush1.msra.mxu0 0.0
    %219 = vmatprep.subr.mxu0 0.0
    %220 = vmatpush1.msra.mxu0 0.0
    %221 = vmatprep.subr.mxu0 0.0
    %222 = vmatpush1.msra.mxu0 0.0
    %223 = vmatprep.subr.mxu0 0.0
    %224 = vmatpush1.msra.mxu0 0.0
    %225 = vmatprep.subr.mxu0 0.0
    %226 = vmatpush1.msra.mxu0 0.0
    %227 = vmatprep.mubr.f32.mxu0 0.0
    %228 = vmatmul.mubr.f32.gmra.mrb[0].mxu0 %v148
    %v229 = vpop.f32.mrb[0].mxu0
    %v230 = vadd.f32 0.0, %v229
    %v231 = vpop.f32.mrb[0].mxu0
    %232 = vmatprep.mubr.f32.mxu0 0.0
    %233 = vmatmul.mubr.f32.gmra.mrb[0].mxu0 %v151
    %v234 = vpop.f32.mrb[0].mxu0
    %v235 = vadd.f32 0.0, %v234
    %v236 = vpop.f32.mrb[0].mxu0
    %237 = vmatprep.mubr.f32.mxu0 0.0
    %238 = vmatmul.mubr.f32.gmra.mrb[0].mxu0 %v154
    %v239 = vpop.f32.mrb[0].mxu0
    %v240 = vadd.f32 0.0, %v239
    %v241 = vpop.f32.mrb[0].mxu0
    %242 = vmatprep.mubr.f32.mxu0 0.0
    %243 = vmatmul.mubr.f32.gmra.mrb[0].mxu0 %v157
    %v244 = vpop.f32.mrb[0].mxu0
    %v245 = vadd.f32 0.0, %v244
    %v246 = vpop.f32.mrb[0].mxu0
    %247 = vdwg.mxu0
    %v248 = vld [vmem:[%s4] sm:$0x7]
    %vm249 = vcmask 23552
    %v251 = vsel %vm249, %v137, 0
    %v254 = vsel %vm249, %v138, 0
    %v257 = vsel %vm249, %v139, 0
    %v260 = vsel %vm249, %v140, 0
    %vm262 = vcmask 1042432
    %v264 = vsel %vm262, %v248, 0
    %266 = vmatprep.subr.mxu0 0.0
    %267 = vmatpush1.msra.mxu0 %v264
    %268 = vmatprep.subr.mxu0 0.0
    %269 = vmatpush1.msra.mxu0 0.0
    %270 = vmatprep.subr.mxu0 0.0
    %271 = vmatpush1.msra.mxu0 0.0
    %272 = vmatprep.subr.mxu0 0.0
    %273 = vmatpush1.msra.mxu0 0.0
    %274 = vmatprep.subr.mxu0 0.0
    %275 = vmatpush1.msra.mxu0 0.0
    %276 = vmatprep.subr.mxu0 0.0
    %277 = vmatpush1.msra.mxu0 0.0
    %278 = vmatprep.subr.mxu0 0.0
    %279 = vmatpush1.msra.mxu0 0.0
    %280 = vmatprep.subr.mxu0 0.0
    %281 = vmatpush1.msra.mxu0 0.0
    %282 = vmatprep.subr.mxu0 0.0
    %283 = vmatpush1.msra.mxu0 0.0
    %284 = vmatprep.subr.mxu0 0.0
    %285 = vmatpush1.msra.mxu0 0.0
    %286 = vmatprep.subr.mxu0 0.0
    %287 = vmatpush1.msra.mxu0 0.0
    %288 = vmatprep.subr.mxu0 0.0
    %289 = vmatpush1.msra.mxu0 0.0
    %290 = vmatprep.subr.mxu0 0.0
    %291 = vmatpush1.msra.mxu0 0.0
    %292 = vmatprep.subr.mxu0 0.0
    %293 = vmatpush1.msra.mxu0 0.0
    %294 = vmatprep.subr.mxu0 0.0
    %295 = vmatpush1.msra.mxu0 0.0
    %296 = vmatprep.subr.mxu0 0.0
    %297 = vmatpush1.msra.mxu0 0.0
    %298 = vmatprep.subr.mxu0 0.0
    %299 = vmatpush1.msra.mxu0 0.0
    %300 = vmatprep.subr.mxu0 0.0
    %301 = vmatpush1.msra.mxu0 0.0
    %302 = vmatprep.subr.mxu0 0.0
    %303 = vmatpush1.msra.mxu0 0.0
    %304 = vmatprep.subr.mxu0 0.0
    %305 = vmatpush1.msra.mxu0 0.0
    %306 = vmatprep.subr.mxu0 0.0
    %307 = vmatpush1.msra.mxu0 0.0
    %308 = vmatprep.subr.mxu0 0.0
    %309 = vmatpush1.msra.mxu0 0.0
    %310 = vmatprep.subr.mxu0 0.0
    %311 = vmatpush1.msra.mxu0 0.0
    %312 = vmatprep.subr.mxu0 0.0
    %313 = vmatpush1.msra.mxu0 0.0
    %314 = vmatprep.subr.mxu0 0.0
    %315 = vmatpush1.msra.mxu0 0.0
    %316 = vmatprep.subr.mxu0 0.0
    %317 = vmatpush1.msra.mxu0 0.0
    %318 = vmatprep.subr.mxu0 0.0
    %319 = vmatpush1.msra.mxu0 0.0
    %320 = vmatprep.subr.mxu0 0.0
    %321 = vmatpush1.msra.mxu0 0.0
    %322 = vmatprep.subr.mxu0 0.0
    %323 = vmatpush1.msra.mxu0 0.0
    %324 = vmatprep.subr.mxu0 0.0
    %325 = vmatpush1.msra.mxu0 0.0
    %326 = vmatprep.subr.mxu0 0.0
    %327 = vmatpush1.msra.mxu0 0.0
    %328 = vmatprep.subr.mxu0 0.0
    %329 = vmatpush1.msra.mxu0 0.0
    %330 = vmatprep.mubr.f32.mxu0 0.0
    %331 = vmatmul.mubr.f32.gmra.mrb[0].mxu0 %v251
    %v332 = vpop.f32.mrb[0].mxu0
    %v333 = vadd.f32 0.0, %v332
    %v334 = vpop.f32.mrb[0].mxu0
    %335 = vmatprep.mubr.f32.mxu0 0.0
    %336 = vmatmul.mubr.f32.gmra.mrb[0].mxu0 %v254
    %v337 = vpop.f32.mrb[0].mxu0
    %v338 = vadd.f32 0.0, %v337
    %v339 = vpop.f32.mrb[0].mxu0
    %340 = vmatprep.mubr.f32.mxu0 0.0
    %341 = vmatmul.mubr.f32.gmra.mrb[0].mxu0 %v257
    %v342 = vpop.f32.mrb[0].mxu0
    %v343 = vadd.f32 0.0, %v342
    %v344 = vpop.f32.mrb[0].mxu0
    %345 = vmatprep.mubr.f32.mxu0 0.0
    %346 = vmatmul.mubr.f32.gmra.mrb[0].mxu0 %v260
    %v347 = vpop.f32.mrb[0].mxu0
    %v348 = vadd.f32 0.0, %v347
    %v349 = vpop.f32.mrb[0].mxu0
    %350 = vdwg.mxu0
    %v351 = vmul.f32 %v230, %v333
    %v352 = vmul.f32 %v235, %v338
    %v353 = vmul.f32 %v240, %v343
    %v354 = vmul.f32 %v245, %v348
    %vm355 = vcmask 1031168
    %v356 = vsel %vm355, %v351, 0.0
    %v357 = vrot.slane %v356, 4
    %v358 = vadd.f32 %v356, %v357
    %v359 = vrot.slane %v358, 2
    %v360 = vadd.f32 %v358, %v359
    %v361 = vrot.slane %v360, 1
    %v362 = vadd.f32 %v360, %v361
    %v363 = vsel %vm355, %v352, 0.0
    %v364 = vrot.slane %v363, 4
    %v365 = vadd.f32 %v363, %v364
    %v366 = vrot.slane %v365, 2
    %v367 = vadd.f32 %v365, %v366
    %v368 = vrot.slane %v367, 1
    %v369 = vadd.f32 %v367, %v368
    %v370 = vsel %vm355, %v353, 0.0
    %v371 = vrot.slane %v370, 4
    %v372 = vadd.f32 %v370, %v371
    %v373 = vrot.slane %v372, 2
    %v374 = vadd.f32 %v372, %v373
    %v375 = vrot.slane %v374, 1
    %v376 = vadd.f32 %v374, %v375
    %v377 = vsel %vm355, %v354, 0.0
    %v378 = vrot.slane %v377, 4
    %v379 = vadd.f32 %v377, %v378
    %v380 = vrot.slane %v379, 2
    %v381 = vadd.f32 %v379, %v380
    %v382 = vrot.slane %v381, 1
    %v383 = vadd.f32 %v381, %v382
    %v384 = vmul.f32 %v230, %v133
    %v385 = vmul.f32 %v235, %v134
    %v386 = vmul.f32 %v240, %v135
    %v387 = vmul.f32 %v245, %v136
    %v388 = vsel %vm355, %v384, 0.0
    %v389 = vrot.slane %v388, 4
    %v390 = vadd.f32 %v388, %v389
    %v391 = vrot.slane %v390, 2
    %v392 = vadd.f32 %v390, %v391
    %v393 = vrot.slane %v392, 1
    %v394 = vadd.f32 %v392, %v393
    %v395 = vsel %vm355, %v385, 0.0
    %v396 = vrot.slane %v395, 4
    %v397 = vadd.f32 %v395, %v396
    %v398 = vrot.slane %v397, 2
    %v399 = vadd.f32 %v397, %v398
    %v400 = vrot.slane %v399, 1
    %v401 = vadd.f32 %v399, %v400
    %v402 = vsel %vm355, %v386, 0.0
    %v403 = vrot.slane %v402, 4
    %v404 = vadd.f32 %v402, %v403
    %v405 = vrot.slane %v404, 2
    %v406 = vadd.f32 %v404, %v405
    %v407 = vrot.slane %v406, 1
    %v408 = vadd.f32 %v406, %v407
    %v409 = vsel %vm355, %v387, 0.0
    %v410 = vrot.slane %v409, 4
    %v411 = vadd.f32 %v409, %v410
    %v412 = vrot.slane %v411, 2
    %v413 = vadd.f32 %v411, %v412
    %v414 = vrot.slane %v413, 1
    %v415 = vadd.f32 %v413, %v414
    %v416 = vadd.f32 %v362, %v394
    %v417 = vadd.f32 %v369, %v401
    %v418 = vadd.f32 %v376, %v408
    %v419 = vadd.f32 %v383, %v415
    %vm424 = vcmask 1041409
    %v425 = vsel %vm424, %v417, %v416
    %vm426 = vcmask 1042434
    %v427 = vsel %vm426, %v418, %v425
    %vm428 = vcmask 1043459
    %v429 = vsel %vm428, %v419, %v427
    %vm431 = vcmask 1027072
    %432 = vst.msk [vmem:[#allocation7] sm:$0xf] %vm431, %v429
    %v437 = vsel %vm424, %v369, %v362
    %v438 = vsel %vm426, %v376, %v437
    %v439 = vsel %vm428, %v383, %v438
    %441 = vst.msk [vmem:[#allocation8] sm:$0xf] %vm431, %v439
    // Predicated region
    $region30: #{tpu_custom_call.1} parent=1 // pred_check
      _
    $region31: #{tpu_custom_call.1} parent=1 // pred_check_branch
      %443 = sbr.rel (0) target = $region33
    $region32: #{tpu_custom_call.1} parent=1 // pred_region
      %s445 = ssub.s32 64, 64
      %446 = vsyncadd [#allocation4], %s445
      %s448 = sshll.u32 [#allocation7], 4
      %s449 = int_to_ptr.vmem [resolvable:$true] %s448
      %451 = dma.vmem_to_hbm [thread:$0]  %s449, 64, %s5, [#allocation4]
    $region33: #{tpu_custom_call.1} parent=1 // pred_fallthru
      _
    // Predicated region
    $region34: #{tpu_custom_call.1} parent=1 // pred_check
      _
    $region35: #{tpu_custom_call.1} parent=1 // pred_check_branch
      %453 = sbr.rel (0) target = $region37
    $region36: #{tpu_custom_call.1} parent=1 // pred_region
      %s455 = ssub.s32 64, 64
      %456 = vsyncadd [#allocation9], %s455
      %s458 = sshll.u32 [#allocation8], 4
      %s459 = int_to_ptr.vmem [resolvable:$true] %s458
      %461 = dma.vmem_to_hbm [thread:$0]  %s459, 64, %s6, [#allocation9]
    $region37: #{tpu_custom_call.1} parent=1 // pred_fallthru
      _
    // Predicated region
    $region38: #{tpu_custom_call.1} parent=1 // pred_check
      _
    $region39: #{tpu_custom_call.1} parent=1 // pred_check_branch
      %463 = sbr.rel (0) target = $region41
    $region40: #{tpu_custom_call.1} parent=1 // pred_region
      %464 = dma.done [#allocation4], 64
    $region41: #{tpu_custom_call.1} parent=1 // pred_fallthru
      _
    // Predicated region
    $region42: #{tpu_custom_call.1} parent=1 // pred_check
      _
    $region43: #{tpu_custom_call.1} parent=1 // pred_check_branch
      %466 = sbr.rel (0) target = $region45
    $region44: #{tpu_custom_call.1} parent=1 // pred_region
      %467 = dma.done [#allocation9], 64
    $region45: #{tpu_custom_call.1} parent=1 // pred_fallthru
      _
    %468 = vsyncpa [#allocation3], 1
    %469 = vsyncpa [#allocation6], 1
    %470 = vsyncpa [#allocation4], 1
    %471 = vsyncpa [#allocation9], 1

</llo_original>
